<compile_context>
chip_gen: v7x
topology: tpu7x:2x2x1
jax: 0.10.0
libtpu: 0.0.40
codegen_flags: <defaults>
</compile_context>

<pallas_src>
import jax
import jax.numpy as jnp
from jax.experimental import pallas as pl
from jax.experimental.pallas import tpu as pltpu

EPS = 1e-5                       # nn.LayerNorm default
_INV_SQRT2 = 0.7071067811865476
_SQRT_2_OVER_PI = 0.7978845608028654


def _round_up(a: int, b: int) -> int:
    return (a + b - 1) // b * b


def _cdiv(a: int, b: int) -> int:
    return (a + b - 1) // b


def _default_vmem_limit_bytes() -> int:
    """~80% of per-core VMEM; leaves headroom for Mosaic scratch / spills."""
    cap = None
    if hasattr(pltpu, "get_tpu_info"):
        try:  # hardware-info query only; never guards the kernel itself
            cap = getattr(pltpu.get_tpu_info(), "vmem_capacity_bytes", None)
        except Exception:
            cap = None
    if not cap:
        cap = 64 * 1024 * 1024   # conservative baseline: v7x per-TC physical VMEM
    return int(cap * 0.8)


def _pick_tn(d_in: int, d_out: int, compute_itemsize: int, vmem_limit: int) -> int:
    """Resident W2 when its double-buffered footprint is small vs the VMEM
    budget (v5e/v6e + bf16); otherwise stream ~1024-lane column tiles (v7x)."""
    resident = 2 * d_in * d_out * compute_itemsize
    if d_out <= 2048 or resident * 3 <= vmem_limit:
        return d_out
    for cand in range(1024, 0, -128):
        if d_out % cand == 0:
            return cand
    return d_out


def _make_kernel(d_in, d_out, tn, n_col_steps, compute_dtype, use_tanh_gelu):
    inv_din = 1.0 / float(d_in)
    inv_dout = 1.0 / float(d_out)

    def gelu(a):
        if use_tanh_gelu:
            # tanh approximation -> EUP slot (opt-in; not bit-identical to erf)
            return 0.5 * a * (1.0 + jnp.tanh(_SQRT_2_OVER_PI * (a + 0.044715 * a * a * a)))
        # exact erf GELU, matching F.gelu(approximate='none')
        return 0.5 * a * (1.0 + jax.lax.erf(a * _INV_SQRT2))

    def layernorm(v, gamma, beta, inv_n):
        # fused LN in f32: one stats pass (E[x^2]-E[x]^2) + one normalize pass
        s = jnp.sum(v, axis=-1, keepdims=True)
        sq = jnp.sum(v * v, axis=-1, keepdims=True)
        mu = s * inv_n
        var = jnp.maximum(sq * inv_n - mu * mu, 0.0)
        return (v - mu) * jax.lax.rsqrt(var + EPS) * gamma + beta

    def ln1_proj_gelu(x_ref, g1_ref, b1_ref, w1_ref, bb1_ref):
        x = x_ref[...].astype(jnp.float32)
        h = layernorm(x, g1_ref[...], b1_ref[...], inv_din)
        a = jnp.dot(h.astype(compute_dtype), w1_ref[...],
                    preferred_element_type=jnp.float32) + bb1_ref[...]
        return gelu(a).astype(compute_dtype)

    if n_col_steps == 1:
        # Resident-W2 path (v5e / v6e with bf16 weights, and all small shapes).
        def kernel(x_ref, g1_ref, b1_ref, w1_ref, bb1_ref, w2_ref, bb2_ref,
                   g2_ref, b2_ref, o_ref):
            a = ln1_proj_gelu(x_ref, g1_ref, b1_ref, w1_ref, bb1_ref)
            # f32 accumulator flows straight into LN2 (no bf16 round-trip).
            y = jnp.dot(a, w2_ref[...],
                        preferred_element_type=jnp.float32) + bb2_ref[...]
            o_ref[...] = layernorm(y, g2_ref[...], b2_ref[...],
                                   inv_dout).astype(o_ref.dtype)
        return kernel

    # Streamed-W2 path (v7x / large D_out / f32 weights): W2 arrives in
    # (d_in, tn) column tiles on grid axis j; LN1/W1/GELU run once per row
    # tile; LN2 stats are accumulated per step; LN2 + store on the last step.
    def kernel(x_ref, g1_ref, b1_ref, w1_ref, bb1_ref, w2_ref, bb2_ref,
               g2_ref, b2_ref, o_ref, a_scr, y_scr, s_scr, sq_scr):
        j = pl.program_id(1)

        @pl.when(j == 0)
        def _():
            a_scr[...] = ln1_proj_gelu(x_ref, g1_ref, b1_ref, w1_ref, bb1_ref)
            s_scr[...] = jnp.zeros_like(s_scr)
            sq_scr[...] = jnp.zeros_like(sq_scr)

        y_blk = jnp.dot(a_scr[...], w2_ref[...],
                        preferred_element_type=jnp.float32) + bb2_ref[...]
        y_scr[j] = y_blk
        s_scr[...] = s_scr[...] + jnp.sum(y_blk, axis=-1, keepdims=True)
        sq_scr[...] = sq_scr[...] + jnp.sum(y_blk * y_blk, axis=-1, keepdims=True)

        @pl.when(j == n_col_steps - 1)
        def _():
            mu = s_scr[...] * inv_dout
            var = jnp.maximum(sq_scr[...] * inv_dout - mu * mu, 0.0)
            inv = jax.lax.rsqrt(var + EPS)
            for jj in range(n_col_steps):            # static unroll; static slices
                cols = slice(jj * tn, (jj + 1) * tn)
                yb = y_scr[jj]
                o_ref[:, cols] = ((yb - mu) * inv * g2_ref[:, cols]
                                  + b2_ref[:, cols]).astype(o_ref.dtype)

    return kernel


def wan_image_embedding(x, params, *, tm=256, tn=None,
                        compute_dtype=jnp.bfloat16, out_dtype=None,
                        use_tanh_gelu=False, vmem_limit_bytes=None,
                        target_row_steps=8):
    """x: (..., D_in) -> (..., D_out).  compute_dtype = MXU operand dtype
    (bf16 recommended); LN math and matmul accumulation are always f32."""
    lead_shape = x.shape[:-1]
    d_in = x.shape[-1]
    d_out = params["w2"].shape[1]
    m = 1
    for d in lead_shape:
        m *= d
    x2d = x.reshape(m, d_in)

    compute_dtype = jnp.dtype(compute_dtype)
    if out_dtype is None:
        out_dtype = x.dtype
    if vmem_limit_bytes is None:
        vmem_limit_bytes = _default_vmem_limit_bytes()

    f32 = jnp.float32
    g1 = params["g1"].astype(f32)
    b1 = params["b1"].astype(f32)
    bb1 = params["bb1"].astype(f32)
    bb2 = params["bb2"].astype(f32)
    g2 = params["g2"].astype(f32)
    b2 = params["b2"].astype(f32)
    w1 = params["w1"].astype(compute_dtype)
    w2 = params["w2"].astype(compute_dtype)

    # ---- column (D_out) tiling for W2 ----
    if tn is None:
        tn = _pick_tn(d_in, d_out, compute_dtype.itemsize, vmem_limit_bytes)
    tn = int(tn)
    if d_out % tn != 0:
        raise ValueError(f"tn={tn} must divide D_out={d_out}")
    if tn != d_out and tn % 128 != 0:
        raise ValueError("column tile tn must be a multiple of 128 (or == D_out)")
    n_col_steps = d_out // tn

    # ---- row (token) tiling: aligned to the packed-sublane width, sized so
    # the grid has several steps (megacore + pipeline overlap). ----
    row_align = max(8, 32 // compute_dtype.itemsize)   # 8 f32 / 16 bf16 / 32 int8
    tm_cap = _round_up(max(1, _cdiv(m, max(1, int(target_row_steps)))), row_align)
    tm_eff = max(row_align, min(int(tm), tm_cap, _round_up(m, row_align)))
    tm_eff = _round_up(tm_eff, row_align)
    m_pad = _round_up(m, tm_eff)
    if m_pad != m:
        x2d = jnp.pad(x2d, ((0, m_pad - m), (0, 0)))
    n_row_steps = m_pad // tm_eff

    kernel = _make_kernel(d_in, d_out, tn, n_col_steps, compute_dtype,
                          use_tanh_gelu)

    in_specs = [
        pl.BlockSpec((tm_eff, d_in), lambda i, j: (i, 0)),   # x rows
        pl.BlockSpec((1, d_in), lambda i, j: (0, 0)),        # norm1 gamma
        pl.BlockSpec((1, d_in), lambda i, j: (0, 0)),        # norm1 beta
        pl.BlockSpec((d_in, d_in), lambda i, j: (0, 0)),     # W1 (in, out)
        pl.BlockSpec((1, d_in), lambda i, j: (0, 0)),        # b1
        pl.BlockSpec((d_in, tn), lambda i, j: (0, j)),       # W2 column tile
        pl.BlockSpec((1, tn), lambda i, j: (0, j)),          # b2 column tile
        pl.BlockSpec((1, d_out), lambda i, j: (0, 0)),       # norm2 gamma
        pl.BlockSpec((1, d_out), lambda i, j: (0, 0)),       # norm2 beta
    ]
    out_spec = pl.BlockSpec((tm_eff, d_out), lambda i, j: (i, 0))

    scratch_shapes = []
    if n_col_steps > 1:
        scratch_shapes = [
            pltpu.VMEM((tm_eff, d_in), compute_dtype),            # cached GELU act
            pltpu.VMEM((n_col_steps, tm_eff, tn), jnp.float32),   # pre-LN2 y blocks
            pltpu.VMEM((tm_eff, 1), jnp.float32),                 # running sum
            pltpu.VMEM((tm_eff, 1), jnp.float32),                 # running sum-of-sq
        ]

    out2d = pl.pallas_call(
        kernel,
        out_shape=jax.ShapeDtypeStruct((m_pad, d_out), out_dtype),
        grid_spec=pltpu.PrefetchScalarGridSpec(
            num_scalar_prefetch=0,
            grid=(n_row_steps, n_col_steps),
            in_specs=in_specs,
            out_specs=out_spec,
            scratch_shapes=scratch_shapes,
        ),
        compiler_params=pltpu.CompilerParams(
            dimension_semantics=("parallel", "arbitrary"),
            vmem_limit_bytes=int(vmem_limit_bytes)),
    )(x2d, g1, b1, w1, bb1, w2, bb2, g2, b2)

    if m_pad != m:
        out2d = out2d[:m]
    return out2d.reshape(*lead_shape, d_out)


def init_params(key, in_features, out_features, dtype=jnp.float32):
    """Deterministic synthetic parameters matching WanImageEmbedding's shapes."""
    ks = jax.random.split(key, 4)
    inner = in_features  # FeedForward(mult=1) -> inner_dim = in_features
    return {
        "g1": jnp.ones((1, in_features), dtype),
        "b1": jnp.zeros((1, in_features), dtype),
        # ff.net[0].proj: Linear(in_features, inner); stored transposed (in, out)
        "w1": (jax.random.normal(ks[0], (in_features, inner)) * 0.05).astype(dtype),
        "bb1": (jax.random.normal(ks[1], (1, inner)) * 0.05).astype(dtype),
        # ff.net[2]: Linear(inner, out_features); stored transposed (in, out)
        "w2": (jax.random.normal(ks[2], (inner, out_features)) * 0.05).astype(dtype),
        "bb2": (jax.random.normal(ks[3], (1, out_features)) * 0.05).astype(dtype),
        "g2": jnp.ones((1, out_features), dtype),
        "b2": jnp.zeros((1, out_features), dtype),
    }


def _reference(x, p):
    """Pure-JAX reference mirroring the PyTorch forward."""
    def ln(v, g, b):
        v32 = v.astype(jnp.float32)
        mu = jnp.mean(v32, -1, keepdims=True)
        var = jnp.var(v32, -1, keepdims=True)
        return ((v32 - mu) * jax.lax.rsqrt(var + EPS)) * g + b

    h = ln(x, p["g1"][0], p["b1"][0]).astype(x.dtype)
    h = h @ p["w1"] + p["bb1"][0]
    h = jax.nn.gelu(h, approximate=False)
    h = h @ p["w2"] + p["bb2"][0]
    h = ln(h, p["g2"][0], p["b2"][0]).astype(x.dtype)
    return h


if __name__ == "__main__":
    key = jax.random.PRNGKey(0)
    k1, k2, kp1, kp2 = jax.random.split(key, 4)

    # 1) f32-exact path (resident W2, single column step).
    B, S, D_IN, D_OUT = 2, 8, 32, 64
    x = jax.random.normal(k1, (B, S, D_IN), jnp.float32)
    p = init_params(kp1, D_IN, D_OUT)
    out = jax.block_until_ready(wan_image_embedding(x, p, compute_dtype=jnp.float32))
    ref = _reference(x, p)
    assert out.shape == (B, S, D_OUT)
    assert jnp.allclose(out, ref, atol=1e-4, rtol=1e-4), "mismatch vs reference (f32, resident)"

    # 2) streamed-W2 path (two column steps), f32 compute, padded rows.
    D_OUT2 = 256
    x2 = jax.random.normal(k2, (2, 9, D_IN), jnp.float32)
    p2 = init_params(kp2, D_IN, D_OUT2)
    out2 = jax.block_until_ready(
        wan_image_embedding(x2, p2, tn=128, compute_dtype=jnp.float32))
    ref2 = _reference(x2, p2)
    assert out2.shape == (2, 9, D_OUT2)
    assert jnp.allclose(out2, ref2, atol=1e-4, rtol=1e-4), "mismatch vs reference (f32, streamed)"

    # 3) production-style dtypes: bf16 MXU operands + bf16 output, streamed W2.
    out3 = jax.block_until_ready(
        wan_image_embedding(x2, p2, tn=128, compute_dtype=jnp.bfloat16,
                            out_dtype=jnp.bfloat16))
    rel = (jnp.linalg.norm(out3.astype(jnp.float32) - ref2)
           / jnp.linalg.norm(ref2))
    assert out3.dtype == jnp.bfloat16
    assert rel < 5e-2, f"bf16 path rel err too large: {rel}"

    print("KERNEL_OK")
</pallas_src>

<mosaic_0001>
module attributes {stable_mosaic.version = 11 : i64} {
  func.func @kernel(%arg0: i32, %arg1: i32, %arg2: memref<8x32xf32, #tpu.memory_space<vmem>>, %arg3: memref<1x32xf32, #tpu.memory_space<vmem>>, %arg4: memref<1x32xf32, #tpu.memory_space<vmem>>, %arg5: memref<32x32xf32, #tpu.memory_space<vmem>>, %arg6: memref<1x32xf32, #tpu.memory_space<vmem>>, %arg7: memref<32x64xf32, #tpu.memory_space<vmem>>, %arg8: memref<1x64xf32, #tpu.memory_space<vmem>>, %arg9: memref<1x64xf32, #tpu.memory_space<vmem>>, %arg10: memref<1x64xf32, #tpu.memory_space<vmem>>, %arg11: memref<8x64xf32, #tpu.memory_space<vmem>>) attributes {dimension_semantics = [#tpu.dimension_semantics<parallel>, #tpu.dimension_semantics<arbitrary>], iteration_bounds = array<i64: 2, 1>, scalar_prefetch = 0 : i64, scratch_operands = 0 : i64, tpu.core_type = #tpu.core_type<tc>, window_params = [{transform_indices = @transform_0, window_bounds = array<i64: 8, 32>}, {pipeline_mode = #tpu.pipeline_mode<synchronous>, transform_indices = @transform_1, window_bounds = array<i64: 1, 32>}, {pipeline_mode = #tpu.pipeline_mode<synchronous>, transform_indices = @transform_2, window_bounds = array<i64: 1, 32>}, {pipeline_mode = #tpu.pipeline_mode<synchronous>, transform_indices = @transform_3, window_bounds = array<i64: 32, 32>}, {pipeline_mode = #tpu.pipeline_mode<synchronous>, transform_indices = @transform_4, window_bounds = array<i64: 1, 32>}, {transform_indices = @transform_5, window_bounds = array<i64: 32, 64>}, {transform_indices = @transform_6, window_bounds = array<i64: 1, 64>}, {pipeline_mode = #tpu.pipeline_mode<synchronous>, transform_indices = @transform_7, window_bounds = array<i64: 1, 64>}, {pipeline_mode = #tpu.pipeline_mode<synchronous>, transform_indices = @transform_8, window_bounds = array<i64: 1, 64>}, {transform_indices = @transform_9, window_bounds = array<i64: 8, 64>}]} {
    %c0 = arith.constant 0 : index
    %c0_0 = arith.constant 0 : index
    %0 = vector.load %arg2[%c0, %c0_0] : memref<8x32xf32, #tpu.memory_space<vmem>>, vector<8x32xf32>
    %c0_1 = arith.constant 0 : index
    %c0_2 = arith.constant 0 : index
    %1 = vector.load %arg3[%c0_1, %c0_2] : memref<1x32xf32, #tpu.memory_space<vmem>>, vector<1x32xf32>
    %c0_3 = arith.constant 0 : index
    %c0_4 = arith.constant 0 : index
    %2 = vector.load %arg4[%c0_3, %c0_4] : memref<1x32xf32, #tpu.memory_space<vmem>>, vector<1x32xf32>
    %cst = arith.constant dense<0.000000e+00> : vector<8xf32>
    %3 = vector.multi_reduction <add>, %0, %cst [1] : vector<8x32xf32> to vector<8xf32>
    %4 = vector.shape_cast %3 : vector<8xf32> to vector<8x1xf32>
    %5 = arith.mulf %0, %0 : vector<8x32xf32>
    %cst_5 = arith.constant dense<0.000000e+00> : vector<8xf32>
    %6 = vector.multi_reduction <add>, %5, %cst_5 [1] : vector<8x32xf32> to vector<8xf32>
    %7 = vector.shape_cast %6 : vector<8xf32> to vector<8x1xf32>
    %cst_6 = arith.constant 3.125000e-02 : f32
    %8 = vector.broadcast %cst_6 : f32 to vector<8x1xf32>
    %9 = arith.mulf %4, %8 : vector<8x1xf32>
    %cst_7 = arith.constant 3.125000e-02 : f32
    %10 = vector.broadcast %cst_7 : f32 to vector<8x1xf32>
    %11 = arith.mulf %7, %10 : vector<8x1xf32>
    %12 = arith.mulf %9, %9 : vector<8x1xf32>
    %13 = arith.subf %11, %12 : vector<8x1xf32>
    %cst_8 = arith.constant 0.000000e+00 : f32
    %14 = vector.broadcast %cst_8 : f32 to vector<8x1xf32>
    %15 = arith.maximumf %13, %14 : vector<8x1xf32>
    %16 = vector.broadcast %9 : vector<8x1xf32> to vector<8x32xf32>
    %17 = arith.subf %0, %16 : vector<8x32xf32>
    %cst_9 = arith.constant 9.99999974E-6 : f32
    %18 = vector.broadcast %cst_9 : f32 to vector<8x1xf32>
    %19 = arith.addf %15, %18 : vector<8x1xf32>
    %20 = math.rsqrt %19 : vector<8x1xf32>
    %21 = vector.broadcast %20 : vector<8x1xf32> to vector<8x32xf32>
    %22 = arith.mulf %17, %21 : vector<8x32xf32>
    %23 = vector.broadcast %1 : vector<1x32xf32> to vector<8x32xf32>
    %24 = arith.mulf %22, %23 : vector<8x32xf32>
    %25 = vector.broadcast %2 : vector<1x32xf32> to vector<8x32xf32>
    %26 = arith.addf %24, %25 : vector<8x32xf32>
    %c0_10 = arith.constant 0 : index
    %c0_11 = arith.constant 0 : index
    %27 = vector.load %arg5[%c0_10, %c0_11] : memref<32x32xf32, #tpu.memory_space<vmem>>, vector<32x32xf32>
    %cst_12 = arith.constant dense<0.000000e+00> : vector<8x32xf32>
    %28 = tpu.matmul %26, %27, %cst_12 {dimension_numbers = #tpu.dot_dimension_numbers<[1], [0], [0], [1], [0, 0, 1, 1], [], []>} : vector<8x32xf32>, vector<32x32xf32>, vector<8x32xf32> -> vector<8x32xf32>
    %c0_13 = arith.constant 0 : index
    %c0_14 = arith.constant 0 : index
    %29 = vector.load %arg6[%c0_13, %c0_14] : memref<1x32xf32, #tpu.memory_space<vmem>>, vector<1x32xf32>
    %30 = vector.broadcast %29 : vector<1x32xf32> to vector<8x32xf32>
    %31 = arith.addf %28, %30 : vector<8x32xf32>
    %cst_15 = arith.constant 5.000000e-01 : f32
    %32 = vector.broadcast %cst_15 : f32 to vector<8x32xf32>
    %33 = arith.mulf %32, %31 : vector<8x32xf32>
    %cst_16 = arith.constant 0.707106769 : f32
    %34 = vector.broadcast %cst_16 : f32 to vector<8x32xf32>
    %35 = arith.mulf %31, %34 : vector<8x32xf32>
    %36 = math.erf %35 : vector<8x32xf32>
    %cst_17 = arith.constant 1.000000e+00 : f32
    %37 = vector.broadcast %cst_17 : f32 to vector<8x32xf32>
    %38 = arith.addf %37, %36 : vector<8x32xf32>
    %39 = arith.mulf %33, %38 : vector<8x32xf32>
    %c0_18 = arith.constant 0 : index
    %c0_19 = arith.constant 0 : index
    %40 = vector.load %arg7[%c0_18, %c0_19] : memref<32x64xf32, #tpu.memory_space<vmem>>, vector<32x64xf32>
    %cst_20 = arith.constant dense<0.000000e+00> : vector<8x64xf32>
    %41 = tpu.matmul %39, %40, %cst_20 {dimension_numbers = #tpu.dot_dimension_numbers<[1], [0], [0], [1], [0, 0, 1, 1], [], []>} : vector<8x32xf32>, vector<32x64xf32>, vector<8x64xf32> -> vector<8x64xf32>
    %c0_21 = arith.constant 0 : index
    %c0_22 = arith.constant 0 : index
    %42 = vector.load %arg8[%c0_21, %c0_22] : memref<1x64xf32, #tpu.memory_space<vmem>>, vector<1x64xf32>
    %43 = vector.broadcast %42 : vector<1x64xf32> to vector<8x64xf32>
    %44 = arith.addf %41, %43 : vector<8x64xf32>
    %c0_23 = arith.constant 0 : index
    %c0_24 = arith.constant 0 : index
    %45 = vector.load %arg9[%c0_23, %c0_24] : memref<1x64xf32, #tpu.memory_space<vmem>>, vector<1x64xf32>
    %c0_25 = arith.constant 0 : index
    %c0_26 = arith.constant 0 : index
    %46 = vector.load %arg10[%c0_25, %c0_26] : memref<1x64xf32, #tpu.memory_space<vmem>>, vector<1x64xf32>
    %cst_27 = arith.constant dense<0.000000e+00> : vector<8xf32>
    %47 = vector.multi_reduction <add>, %44, %cst_27 [1] : vector<8x64xf32> to vector<8xf32>
    %48 = vector.shape_cast %47 : vector<8xf32> to vector<8x1xf32>
    %49 = arith.mulf %44, %44 : vector<8x64xf32>
    %cst_28 = arith.constant dense<0.000000e+00> : vector<8xf32>
    %50 = vector.multi_reduction <add>, %49, %cst_28 [1] : vector<8x64xf32> to vector<8xf32>
    %51 = vector.shape_cast %50 : vector<8xf32> to vector<8x1xf32>
    %cst_29 = arith.constant 1.562500e-02 : f32
    %52 = vector.broadcast %cst_29 : f32 to vector<8x1xf32>
    %53 = arith.mulf %48, %52 : vector<8x1xf32>
    %cst_30 = arith.constant 1.562500e-02 : f32
    %54 = vector.broadcast %cst_30 : f32 to vector<8x1xf32>
    %55 = arith.mulf %51, %54 : vector<8x1xf32>
    %56 = arith.mulf %53, %53 : vector<8x1xf32>
    %57 = arith.subf %55, %56 : vector<8x1xf32>
    %cst_31 = arith.constant 0.000000e+00 : f32
    %58 = vector.broadcast %cst_31 : f32 to vector<8x1xf32>
    %59 = arith.maximumf %57, %58 : vector<8x1xf32>
    %60 = vector.broadcast %53 : vector<8x1xf32> to vector<8x64xf32>
    %61 = arith.subf %44, %60 : vector<8x64xf32>
    %cst_32 = arith.constant 9.99999974E-6 : f32
    %62 = vector.broadcast %cst_32 : f32 to vector<8x1xf32>
    %63 = arith.addf %59, %62 : vector<8x1xf32>
    %64 = math.rsqrt %63 : vector<8x1xf32>
    %65 = vector.broadcast %64 : vector<8x1xf32> to vector<8x64xf32>
    %66 = arith.mulf %61, %65 : vector<8x64xf32>
    %67 = vector.broadcast %45 : vector<1x64xf32> to vector<8x64xf32>
    %68 = arith.mulf %66, %67 : vector<8x64xf32>
    %69 = vector.broadcast %46 : vector<1x64xf32> to vector<8x64xf32>
    %70 = arith.addf %68, %69 : vector<8x64xf32>
    %c0_33 = arith.constant 0 : index
    %c0_34 = arith.constant 0 : index
    %71 = vector.load %arg11[%c0_33, %c0_34] : memref<8x64xf32, #tpu.memory_space<vmem>>, vector<8x64xf32>
    tpu.vector_store %arg11[%c0_33, %c0_34], %70 {strides = array<i32>} : memref<8x64xf32, #tpu.memory_space<vmem>>, vector<8x64xf32>,
    return
  }
  func.func @transform_0(%arg0: i32, %arg1: i32) -> (i32, i32) {
    %c0_i32 = arith.constant 0 : i32
    %c0_i32_0 = arith.constant 0 : i32
    return %arg0, %c0_i32 : i32, i32
  }
  func.func @transform_1(%arg0: i32, %arg1: i32) -> (i32, i32) {
    %c0_i32 = arith.constant 0 : i32
    %c0_i32_0 = arith.constant 0 : i32
    %c0_i32_1 = arith.constant 0 : i32
    return %c0_i32, %c0_i32_0 : i32, i32
  }
  func.func @transform_2(%arg0: i32, %arg1: i32) -> (i32, i32) {
    %c0_i32 = arith.constant 0 : i32
    %c0_i32_0 = arith.constant 0 : i32
    %c0_i32_1 = arith.constant 0 : i32
    return %c0_i32, %c0_i32_0 : i32, i32
  }
  func.func @transform_3(%arg0: i32, %arg1: i32) -> (i32, i32) {
    %c0_i32 = arith.constant 0 : i32
    %c0_i32_0 = arith.constant 0 : i32
    %c0_i32_1 = arith.constant 0 : i32
    return %c0_i32, %c0_i32_0 : i32, i32
  }
  func.func @transform_4(%arg0: i32, %arg1: i32) -> (i32, i32) {
    %c0_i32 = arith.constant 0 : i32
    %c0_i32_0 = arith.constant 0 : i32
    %c0_i32_1 = arith.constant 0 : i32
    return %c0_i32, %c0_i32_0 : i32, i32
  }
  func.func @transform_5(%arg0: i32, %arg1: i32) -> (i32, i32) {
    %c0_i32 = arith.constant 0 : i32
    %c0_i32_0 = arith.constant 0 : i32
    return %c0_i32, %arg1 : i32, i32
  }
  func.func @transform_6(%arg0: i32, %arg1: i32) -> (i32, i32) {
    %c0_i32 = arith.constant 0 : i32
    %c0_i32_0 = arith.constant 0 : i32
    return %c0_i32, %arg1 : i32, i32
  }
  func.func @transform_7(%arg0: i32, %arg1: i32) -> (i32, i32) {
    %c0_i32 = arith.constant 0 : i32
    %c0_i32_0 = arith.constant 0 : i32
    %c0_i32_1 = arith.constant 0 : i32
    return %c0_i32, %c0_i32_0 : i32, i32
  }
  func.func @transform_8(%arg0: i32, %arg1: i32) -> (i32, i32) {
    %c0_i32 = arith.constant 0 : i32
    %c0_i32_0 = arith.constant 0 : i32
    %c0_i32_1 = arith.constant 0 : i32
    return %c0_i32, %c0_i32_0 : i32, i32
  }
  func.func @transform_9(%arg0: i32, %arg1: i32) -> (i32, i32) {
    %c0_i32 = arith.constant 0 : i32
    %c0_i32_0 = arith.constant 0 : i32
    return %arg0, %c0_i32 : i32, i32
  }
}

</mosaic_0001>

<llo_original>
// kernel: tpu_custom_call.1
$region0: #{tpu_custom_call.1}
  #allocation0 [shape = 'u32[]', space=smem, size = 0x4, offset = 0x4, fixed_abs, tag = 'smem constant byte address 0x4 - core index']
  #allocation1 [shape = 'u32[144,128]{1,0:T(1,128)}', space=vmem, size = 0x12000, scoped, tag = 'internal scratch']
  %s0 = inlined_call_operand.hbm [shape: f32[16,32], index: 0, kind: input, shape index: {}]
  %s1 = inlined_call_operand.vmem [shape: f32[1,32], index: 1, kind: input, shape index: {}]
  %s2 = inlined_call_operand.vmem [shape: f32[1,32], index: 2, kind: input, shape index: {}]
  %s3 = inlined_call_operand.hbm [shape: f32[32,32], index: 3, kind: input, shape index: {}]
  %s4 = inlined_call_operand.vmem [shape: f32[1,32], index: 4, kind: input, shape index: {}]
  %s5 = inlined_call_operand.hbm [shape: f32[32,64], index: 5, kind: input, shape index: {}]
  %s6 = inlined_call_operand.vmem [shape: f32[1,64], index: 6, kind: input, shape index: {}]
  %s7 = inlined_call_operand.vmem [shape: f32[1,64], index: 7, kind: input, shape index: {}]
  %s8 = inlined_call_operand.vmem [shape: f32[1,64], index: 8, kind: input, shape index: {}]
  %s9 = inlined_call_operand.hbm [shape: f32[16,64], index: 9, kind: output, shape index: {}]
  %s10 = sld [smem:[#allocation0]]
  $region81: #{tpu_custom_call.1} parent=0
    _
  %s12 = ssub.s32 1, %s10
  %s13 = scalar_select 0, %s12, %s10
  $region1: #{tpu_custom_call.1} parent=0
    #allocation2 [shape = 'u8[8192]{0}', space=vmem, size = 0x2000, scoped, tag = 'input window, operand 0']
    #allocation3 [shape = 's32[2]{0}', space=sflag, size = 0x8, scoped, tag = 'scoped memory for tpu_custom_call.1']
    #allocation4 [shape = 's32[2]{0}', space=sflag, size = 0x8, scoped, tag = 'scoped memory for tpu_custom_call.1']
    #allocation5 [shape = 'u8[16384]{0}', space=vmem, size = 0x4000, scoped, tag = 'input window, operand 3, single buffered']
    #allocation6 [shape = 's32[1]{0}', space=sflag, size = 0x4, scoped, tag = 'scoped memory for tpu_custom_call.1']
    #allocation7 [shape = 'u8[16384]{0}', space=vmem, size = 0x4000, scoped, tag = 'input window, operand 5, single buffered']
    #allocation8 [shape = 'u8[8192]{0}', space=vmem, size = 0x2000, scoped, tag = 'output window, operand 0']
    %14 = vsyncpa [#allocation3], 0
    %s15 = scalar_lea.sflag [#allocation3], 1
    %16 = vsyncpa %s15, 0
    %17 = vsyncpa [#allocation6], 0
    %18 = vsyncpa [#allocation4], 0
    %s19 = scalar_lea.sflag [#allocation4], 1
    %20 = vsyncpa %s19, 0
    loop: start=0, step=1, limit=4
    $region2: #{tpu_custom_call.1} parent=1 // loop_pre_header
      _
    $region3: #{tpu_custom_call.1} parent=1 // loop_header
      %s22 = sphi 0, %s26
      %p23 = scmp.ge.s32.totalorder %s22, 4
      %s29 = sphi 0, %s41
      %s30 = sphi 0, %s37
      %s31 = sphi 0, %s29
      %s32 = sphi 0, %s30
      %s33 = sphi 0, %s31
      %s34 = sphi 0, %s32
      %s44 = sphi 0, %s46
      %s47 = sphi 0, %s44
      %s48 = sphi 0, %s47
      %s64 = sphi 0, %s48
      %s68 = sphi 0, %s68
      %s70 = sphi 0, %s68
      %s71 = sphi 0, %s70
      %s85 = sphi 0, %s71
      %s89 = sphi 0, %s89
      %s91 = sphi 0, %s89
      %s92 = sphi 0, %s91
      %s106 = sphi 0, %s92
      %s110 = sphi 0, %s110
      %s112 = sphi 0, %s110
      %s113 = sphi 0, %s112
      %s127 = sphi 0, %s113
      %s131 = sphi 0, %s131
      %s133 = sphi 0, %s131
      %s134 = sphi 0, %s133
      %s148 = sphi 0, %s134
      %s154 = sphi 0, %s156
      %s157 = sphi 0, %s154
      %s158 = sphi 0, %s157
      %s174 = sphi 0, %s158
      %s180 = sphi 0, %s182
      %s183 = sphi 0, %s180
      %s184 = sphi 0, %s183
      %s200 = sphi 0, %s184
      %s204 = sphi 0, %s204
      %s206 = sphi 0, %s204
      %s207 = sphi 0, %s206
      %s221 = sphi 0, %s207
      %s225 = sphi 0, %s225
      %s227 = sphi 0, %s225
      %s228 = sphi 0, %s227
      %s242 = sphi 0, %s228
      %s248 = sphi 0, %s250
      %s251 = sphi 0, %s248
      %s252 = sphi 0, %s251
      %s268 = sphi 0, %s252
    $region4: #{tpu_custom_call.1} parent=1 // loop_header_branch
      %25 = sbr.rel (%p23) target = $region8
    $region5: #{tpu_custom_call.1} parent=1 // loop_body
      %s27 = ssub.s32 %s22, 1
      %s28 = ssub.s32 %s22, 2
      %s35 = sadd.s32 1, %s30
      %p36 = scmp.ge.s32.totalorder %s35, 1
      %s37 = scalar_select %p36, 0, %s35
      %s38 = sadd.s32 1, %s29
      %s39 = scalar_select %p36, %s38, %s29
      %p40 = scmp.ge.s32.totalorder %s39, 2
      %s41 = scalar_select %p40, 0, %s39
      %s42 = ssub.s32 %s29, %s41
      %p43 = scmp.eq.s32.totalorder %s42, 0
      %s45 = sadd.s32 %s44, 1
      %s46 = scalar_select %p43, %s44, %s45
      %p49 = pneg %p43
      %p50 = scmp.eq.s32.totalorder %s22, 1
      %p51 = por %p49, %p50
      %p52 = scmp.ne.s32.totalorder %s44, %s47
      %p53 = scmp.eq.s32.totalorder %s22, 0
      %p54 = por %p52, %p53
      %p55 = scmp.ne.s32.totalorder %s44, %s47
      %p56 = scmp.eq.s32.totalorder %s27, 1
      %p57 = por %p55, %p56
      %p58 = scmp.ne.s32.totalorder %s47, %s48
      %p59 = scmp.eq.s32.totalorder %s27, 0
      %p60 = por %p58, %p59
      %p61 = scmp.ne.s32.totalorder %s47, %s48
      %p62 = scmp.eq.s32.totalorder %s28, 1
      %p63 = por %p61, %p62
      %p65 = scmp.ne.s32.totalorder %s48, %s64
      %p66 = scmp.eq.s32.totalorder %s28, 0
      %p67 = por %p65, %p66
      %s69 = sadd.s32 %s68, 1
      %p72 = scmp.eq.s32.totalorder %s22, 1
      %p73 = scmp.ne.s32.totalorder %s68, %s70
      %p74 = scmp.eq.s32.totalorder %s22, 0
      %p75 = por %p73, %p74
      %p76 = scmp.ne.s32.totalorder %s68, %s70
      %p77 = scmp.eq.s32.totalorder %s27, 1
      %p78 = por %p76, %p77
      %p79 = scmp.ne.s32.totalorder %s70, %s71
      %p80 = scmp.eq.s32.totalorder %s27, 0
      %p81 = por %p79, %p80
      %p82 = scmp.ne.s32.totalorder %s70, %s71
      %p83 = scmp.eq.s32.totalorder %s28, 1
      %p84 = por %p82, %p83
      %p86 = scmp.ne.s32.totalorder %s71, %s85
      %p87 = scmp.eq.s32.totalorder %s28, 0
      %p88 = por %p86, %p87
      %s90 = sadd.s32 %s89, 1
      %p93 = scmp.eq.s32.totalorder %s22, 1
      %p94 = scmp.ne.s32.totalorder %s89, %s91
      %p95 = scmp.eq.s32.totalorder %s22, 0
      %p96 = por %p94, %p95
      %p97 = scmp.ne.s32.totalorder %s89, %s91
      %p98 = scmp.eq.s32.totalorder %s27, 1
      %p99 = por %p97, %p98
      %p100 = scmp.ne.s32.totalorder %s91, %s92
      %p101 = scmp.eq.s32.totalorder %s27, 0
      %p102 = por %p100, %p101
      %p103 = scmp.ne.s32.totalorder %s91, %s92
      %p104 = scmp.eq.s32.totalorder %s28, 1
      %p105 = por %p103, %p104
      %p107 = scmp.ne.s32.totalorder %s92, %s106
      %p108 = scmp.eq.s32.totalorder %s28, 0
      %p109 = por %p107, %p108
      %s111 = sadd.s32 %s110, 1
      %p114 = scmp.eq.s32.totalorder %s22, 1
      %p115 = scmp.ne.s32.totalorder %s110, %s112
      %p116 = scmp.eq.s32.totalorder %s22, 0
      %p117 = por %p115, %p116
      %p118 = scmp.ne.s32.totalorder %s110, %s112
      %p119 = scmp.eq.s32.totalorder %s27, 1
      %p120 = por %p118, %p119
      %p121 = scmp.ne.s32.totalorder %s112, %s113
      %p122 = scmp.eq.s32.totalorder %s27, 0
      %p123 = por %p121, %p122
      %p124 = scmp.ne.s32.totalorder %s112, %s113
      %p125 = scmp.eq.s32.totalorder %s28, 1
      %p126 = por %p124, %p125
      %p128 = scmp.ne.s32.totalorder %s113, %s127
      %p129 = scmp.eq.s32.totalorder %s28, 0
      %p130 = por %p128, %p129
      %s132 = sadd.s32 %s131, 1
      %p135 = scmp.eq.s32.totalorder %s22, 1
      %p136 = scmp.ne.s32.totalorder %s131, %s133
      %p137 = scmp.eq.s32.totalorder %s22, 0
      %p138 = por %p136, %p137
      %p139 = scmp.ne.s32.totalorder %s131, %s133
      %p140 = scmp.eq.s32.totalorder %s27, 1
      %p141 = por %p139, %p140
      %p142 = scmp.ne.s32.totalorder %s133, %s134
      %p143 = scmp.eq.s32.totalorder %s27, 0
      %p144 = por %p142, %p143
      %p145 = scmp.ne.s32.totalorder %s133, %s134
      %p146 = scmp.eq.s32.totalorder %s28, 1
      %p147 = por %p145, %p146
      %p149 = scmp.ne.s32.totalorder %s134, %s148
      %p150 = scmp.eq.s32.totalorder %s28, 0
      %p151 = por %p149, %p150
      %s152 = ssub.s32 %s30, %s37
      %p153 = scmp.eq.s32.totalorder %s152, 0
      %s155 = sadd.s32 %s154, 1
      %s156 = scalar_select %p153, %s154, %s155
      %p159 = pneg %p153
      %p160 = scmp.eq.s32.totalorder %s22, 1
      %p161 = por %p159, %p160
      %p162 = scmp.ne.s32.totalorder %s154, %s157
      %p163 = scmp.eq.s32.totalorder %s22, 0
      %p164 = por %p162, %p163
      %p165 = scmp.ne.s32.totalorder %s154, %s157
      %p166 = scmp.eq.s32.totalorder %s27, 1
      %p167 = por %p165, %p166
      %p168 = scmp.ne.s32.totalorder %s157, %s158
      %p169 = scmp.eq.s32.totalorder %s27, 0
      %p170 = por %p168, %p169
      %p171 = scmp.ne.s32.totalorder %s157, %s158
      %p172 = scmp.eq.s32.totalorder %s28, 1
      %p173 = por %p171, %p172
      %p175 = scmp.ne.s32.totalorder %s158, %s174
      %p176 = scmp.eq.s32.totalorder %s28, 0
      %p177 = por %p175, %p176
      %s178 = ssub.s32 %s30, %s37
      %p179 = scmp.eq.s32.totalorder %s178, 0
      %s181 = sadd.s32 %s180, 1
      %s182 = scalar_select %p179, %s180, %s181
      %p185 = pneg %p179
      %p186 = scmp.eq.s32.totalorder %s22, 1
      %p187 = por %p185, %p186
      %p188 = scmp.ne.s32.totalorder %s180, %s183
      %p189 = scmp.eq.s32.totalorder %s22, 0
      %p190 = por %p188, %p189
      %p191 = scmp.ne.s32.totalorder %s180, %s183
      %p192 = scmp.eq.s32.totalorder %s27, 1
      %p193 = por %p191, %p192
      %p194 = scmp.ne.s32.totalorder %s183, %s184
      %p195 = scmp.eq.s32.totalorder %s27, 0
      %p196 = por %p194, %p195
      %p197 = scmp.ne.s32.totalorder %s183, %s184
      %p198 = scmp.eq.s32.totalorder %s28, 1
      %p199 = por %p197, %p198
      %p201 = scmp.ne.s32.totalorder %s184, %s200
      %p202 = scmp.eq.s32.totalorder %s28, 0
      %p203 = por %p201, %p202
      %s205 = sadd.s32 %s204, 1
      %p208 = scmp.eq.s32.totalorder %s22, 1
      %p209 = scmp.ne.s32.totalorder %s204, %s206
      %p210 = scmp.eq.s32.totalorder %s22, 0
      %p211 = por %p209, %p210
      %p212 = scmp.ne.s32.totalorder %s204, %s206
      %p213 = scmp.eq.s32.totalorder %s27, 1
      %p214 = por %p212, %p213
      %p215 = scmp.ne.s32.totalorder %s206, %s207
      %p216 = scmp.eq.s32.totalorder %s27, 0
      %p217 = por %p215, %p216
      %p218 = scmp.ne.s32.totalorder %s206, %s207
      %p219 = scmp.eq.s32.totalorder %s28, 1
      %p220 = por %p218, %p219
      %p222 = scmp.ne.s32.totalorder %s207, %s221
      %p223 = scmp.eq.s32.totalorder %s28, 0
      %p224 = por %p222, %p223
      %s226 = sadd.s32 %s225, 1
      %p229 = scmp.eq.s32.totalorder %s22, 1
      %p230 = scmp.ne.s32.totalorder %s225, %s227
      %p231 = scmp.eq.s32.totalorder %s22, 0
      %p232 = por %p230, %p231
      %p233 = scmp.ne.s32.totalorder %s225, %s227
      %p234 = scmp.eq.s32.totalorder %s27, 1
      %p235 = por %p233, %p234
      %p236 = scmp.ne.s32.totalorder %s227, %s228
      %p237 = scmp.eq.s32.totalorder %s27, 0
      %p238 = por %p236, %p237
      %p239 = scmp.ne.s32.totalorder %s227, %s228
      %p240 = scmp.eq.s32.totalorder %s28, 1
      %p241 = por %p239, %p240
      %p243 = scmp.ne.s32.totalorder %s228, %s242
      %p244 = scmp.eq.s32.totalorder %s28, 0
      %p245 = por %p243, %p244
      %s246 = ssub.s32 %s29, %s41
      %p247 = scmp.eq.s32.totalorder %s246, 0
      %s249 = sadd.s32 %s248, 1
      %s250 = scalar_select %p247, %s248, %s249
      %p253 = pneg %p247
      %p254 = scmp.eq.s32.totalorder %s22, 1
      %p255 = por %p253, %p254
      %p256 = scmp.ne.s32.totalorder %s248, %s251
      %p257 = scmp.eq.s32.totalorder %s22, 0
      %p258 = por %p256, %p257
      %p259 = scmp.ne.s32.totalorder %s248, %s251
      %p260 = scmp.eq.s32.totalorder %s27, 1
      %p261 = por %p259, %p260
      %p262 = scmp.ne.s32.totalorder %s251, %s252
      %p263 = scmp.eq.s32.totalorder %s27, 0
      %p264 = por %p262, %p263
      %p265 = scmp.ne.s32.totalorder %s251, %s252
      %p266 = scmp.eq.s32.totalorder %s28, 1
      %p267 = por %p265, %p266
      %p269 = scmp.ne.s32.totalorder %s252, %s268
      %p270 = scmp.eq.s32.totalorder %s28, 0
      %p271 = por %p269, %p270
      %p272 = scmp.le.s32.totalorder 1, %s22
      %p273 = scmp.lt.s32.totalorder %s22, 3
      %p274 = pnand %p272, %p273
      %p275 = pneg %p274
      // Predicated region
      $region9: #{tpu_custom_call.1} parent=5 // pred_check
        _
      $region10: #{tpu_custom_call.1} parent=5 // pred_check_branch
        %277 = sbr.rel (%p274) target = $region12
      $region11: #{tpu_custom_call.1} parent=5 // pred_region
        %s278 = ssub.s32 %s22, 1
        // Predicated region
        $region13: #{tpu_custom_call.1} parent=11 // pred_check
          %p279 = pneg %p81
        $region14: #{tpu_custom_call.1} parent=11 // pred_check_branch
          %281 = sbr.rel (%p279) target = $region16
        $region15: #{tpu_custom_call.1} parent=11 // pred_region
          _
        $region16: #{tpu_custom_call.1} parent=11 // pred_fallthru
          _
        // Predicated region
        $region17: #{tpu_custom_call.1} parent=11 // pred_check
          %p282 = pneg %p102
        $region18: #{tpu_custom_call.1} parent=11 // pred_check_branch
          %284 = sbr.rel (%p282) target = $region20
        $region19: #{tpu_custom_call.1} parent=11 // pred_region
          _
        $region20: #{tpu_custom_call.1} parent=11 // pred_fallthru
          _
        // Predicated region
        $region21: #{tpu_custom_call.1} parent=11 // pred_check
          %p285 = pneg %p123
        $region22: #{tpu_custom_call.1} parent=11 // pred_check_branch
          %287 = sbr.rel (%p285) target = $region24
        $region23: #{tpu_custom_call.1} parent=11 // pred_region
          %s289 = ssub.s32 512, 512
          %290 = vsyncadd [#allocation6], %s289
          %s291 = sshll.u32 [#allocation5], 4
          %s292 = int_to_ptr.vmem [resolvable:$true] %s291
          %297 = dma.hbm_to_vmem [thread:$0]  %s3, 512, %s292, [#allocation6], 128, 128, 8
        $region24: #{tpu_custom_call.1} parent=11 // pred_fallthru
          _
        // Predicated region
        $region25: #{tpu_custom_call.1} parent=11 // pred_check
          %p298 = pneg %p144
        $region26: #{tpu_custom_call.1} parent=11 // pred_check_branch
          %300 = sbr.rel (%p298) target = $region28
        $region27: #{tpu_custom_call.1} parent=11 // pred_region
          _
        $region28: #{tpu_custom_call.1} parent=11 // pred_fallthru
          _
        // Predicated region
        $region29: #{tpu_custom_call.1} parent=11 // pred_check
          %p301 = pneg %p170
        $region30: #{tpu_custom_call.1} parent=11 // pred_check_branch
          %303 = sbr.rel (%p301) target = $region32
        $region31: #{tpu_custom_call.1} parent=11 // pred_region
          %s305 = ssub.s32 512, 512
          %306 = vsyncadd [#allocation6], %s305
          %s307 = smul.addr %s32, 128
          %s308 = scalar_lea.hbm %s5, %s307
          %s309 = sshll.u32 [#allocation7], 4
          %s310 = int_to_ptr.vmem [resolvable:$true] %s309
          %315 = dma.hbm_to_vmem [thread:$0]  %s308, 512, %s310, [#allocation6], 128, 128, 8
        $region32: #{tpu_custom_call.1} parent=11 // pred_fallthru
          _
        // Predicated region
        $region33: #{tpu_custom_call.1} parent=11 // pred_check
          %p316 = pneg %p196
        $region34: #{tpu_custom_call.1} parent=11 // pred_check_branch
          %318 = sbr.rel (%p316) target = $region36
        $region35: #{tpu_custom_call.1} parent=11 // pred_region
          %p319 = scmp.lt.s32.totalorder %s32, 0
          %s320 = scalar_select %p319, %s32, 0
          %s321 = scalar_lea.vmem %s6, %s320
        $region36: #{tpu_custom_call.1} parent=11 // pred_fallthru
          _
        // Predicated region
        $region37: #{tpu_custom_call.1} parent=11 // pred_check
          %p322 = pneg %p217
        $region38: #{tpu_custom_call.1} parent=11 // pred_check_branch
          %324 = sbr.rel (%p322) target = $region40
        $region39: #{tpu_custom_call.1} parent=11 // pred_region
          _
        $region40: #{tpu_custom_call.1} parent=11 // pred_fallthru
          _
        // Predicated region
        $region41: #{tpu_custom_call.1} parent=11 // pred_check
          %p325 = pneg %p238
        $region42: #{tpu_custom_call.1} parent=11 // pred_check_branch
          %327 = sbr.rel (%p325) target = $region44
        $region43: #{tpu_custom_call.1} parent=11 // pred_region
          _
        $region44: #{tpu_custom_call.1} parent=11 // pred_fallthru
          _
      $region12: #{tpu_custom_call.1} parent=5 // pred_fallthru
        _
      %p328 = scmp.lt.s32.totalorder %s22, 2
      // Predicated region
      $region45: #{tpu_custom_call.1} parent=5 // pred_check
        %p329 = pneg %p328
      $region46: #{tpu_custom_call.1} parent=5 // pred_check_branch
        %331 = sbr.rel (%p329) target = $region48
      $region47: #{tpu_custom_call.1} parent=5 // pred_region
        // Predicated region
        $region49: #{tpu_custom_call.1} parent=47 // pred_check
          %p332 = pneg %p54
        $region50: #{tpu_custom_call.1} parent=47 // pred_check_branch
          %334 = sbr.rel (%p332) target = $region52
        $region51: #{tpu_custom_call.1} parent=47 // pred_region
          %s335 = sand.u32 %s44, 1
          %s336 = scalar_lea.sflag [#allocation3], %s335
          %s337 = sand.u32 %s44, 1
          %s338 = smul.addr %s337, 8
          %s339 = scalar_lea.vmem [#allocation2], %s338
          %s341 = ssub.s32 128, 128
          %342 = vsyncadd %s336, %s341
          %s343 = smul.addr %s29, 128
          %s344 = scalar_lea.hbm %s0, %s343
          %s346 = sshll.u32 %s339, 4
          %s347 = int_to_ptr.vmem [resolvable:$true] %s346
          %349 = dma.hbm_to_vmem [thread:$0]  %s344, 128, %s347, %s336
        $region52: #{tpu_custom_call.1} parent=47 // pred_fallthru
          _
      $region48: #{tpu_custom_call.1} parent=5 // pred_fallthru
        _
      %p350 = scmp.le.s32.totalorder 1, %s22
      %p351 = scmp.lt.s32.totalorder %s22, 3
      %p352 = pnand %p350, %p351
      %p353 = pneg %p352
      // Predicated region
      $region53: #{tpu_custom_call.1} parent=5 // pred_check
        _
      $region54: #{tpu_custom_call.1} parent=5 // pred_check_branch
        %355 = sbr.rel (%p352) target = $region56
      $region55: #{tpu_custom_call.1} parent=5 // pred_region
        %s356 = ssub.s32 %s22, 1
        %s357 = sand.u32 %s47, 1
        %s358 = scalar_lea.sflag [#allocation3], %s357
        %s359 = sand.u32 %s47, 1
        %s360 = smul.addr %s359, 8
        %s361 = scalar_lea.vmem [#allocation2], %s360
        // Predicated region
        $region57: #{tpu_custom_call.1} parent=55 // pred_check
          %p362 = pneg %p60
        $region58: #{tpu_custom_call.1} parent=55 // pred_check_branch
          %364 = sbr.rel (%p362) target = $region60
        $region59: #{tpu_custom_call.1} parent=55 // pred_region
          %365 = dma.done %s358, 128
        $region60: #{tpu_custom_call.1} parent=55 // pred_fallthru
          _
        // Predicated region
        $region61: #{tpu_custom_call.1} parent=55 // pred_check
          %p366 = pneg %p123
        $region62: #{tpu_custom_call.1} parent=55 // pred_check_branch
          %368 = sbr.rel (%p366) target = $region64
        $region63: #{tpu_custom_call.1} parent=55 // pred_region
          %369 = dma.done [#allocation6], 512
        $region64: #{tpu_custom_call.1} parent=55 // pred_fallthru
          _
        // Predicated region
        $region65: #{tpu_custom_call.1} parent=55 // pred_check
          %p370 = pneg %p170
        $region66: #{tpu_custom_call.1} parent=55 // pred_check_branch
          %372 = sbr.rel (%p370) target = $region68
        $region67: #{tpu_custom_call.1} parent=55 // pred_region
          %373 = dma.done [#allocation6], 512
        $region68: #{tpu_custom_call.1} parent=55 // pred_fallthru
          _
        %s374 = sand.u32 %s47, 1
        %s375 = scalar_lea.sflag [#allocation3], %s374
        %s376 = sand.u32 %s47, 1
        %s377 = smul.addr %s376, 8
        %s378 = scalar_lea.vmem [#allocation2], %s377
        %p379 = pneg %p60
        %p380 = pneg %p57
        %p381 = pneg %p81
        %p382 = pneg %p78
        %p383 = pneg %p102
        %p384 = pneg %p99
        %p385 = pneg %p123
        %p386 = pneg %p120
        %p387 = pneg %p144
        %p388 = pneg %p141
        %p389 = pneg %p170
        %p390 = pneg %p167
        %p391 = scmp.lt.s32.totalorder %s32, 0
        %s392 = scalar_select %p391, %s32, 0
        %s393 = scalar_lea.vmem %s6, %s392
        %p394 = pneg %p196
        %p395 = pneg %p193
        %p396 = pneg %p217
        %p397 = pneg %p214
        %p398 = pneg %p238
        %p399 = pneg %p235
        %p400 = pneg %p264
        %p401 = pneg %p261
        %s402 = sand.u32 %s251, 1
        %s403 = scalar_lea.sflag [#allocation4], %s402
        %s404 = sand.u32 %s251, 1
        %s405 = smul.addr %s404, 8
        %s406 = scalar_lea.vmem [#allocation8], %s405
        %p407 = scmp.lt.s32.totalorder %s32, 0
        %s408 = scalar_select %p407, %s32, 0
        %s409 = scalar_lea.vmem %s6, %s408
        %v410 = vld [vmem:[%s361] sm:$0xff]
        %v411 = vld [vmem:[%s1] sm:$0x1]
        %v412 = vld [vmem:[%s2] sm:$0x1]
        %vm413 = vcmask 261120
        %v414 = vsel %vm413, %v410, 0.0
        %415 = vadd.xlane.f32.xlu0 %v414
        %v416 = vpop.xlane.xlu0 %415
        %v417 = vmul.f32 %v410, %v410
        %v418 = vsel %vm413, %v417, 0.0
        %419 = vadd.xlane.f32.xlu0 %v418
        %v420 = vpop.xlane.xlu0 %419
        %v421 = vmul.f32 %v416, 0.03125
        %v422 = vmul.f32 %v420, 0.03125
        %v423 = vmul.f32 %v421, %v421
        %v424 = vsub.f32 %v422, %v423
        %v425 = vmax.f32 %v424, 0.0
        %v426 = vsub.f32 %v410, %v421
        %v427 = vadd.f32 %v425, 1e-05
        %v428 = vrsqrt.pop %v427
        %v429 = vmul.f32 %v426, %v428
        %v431 = vlaneseq
        %v432 = vshrl.u32 %v431, 7
        %v433 = vsub.s32 0, %v432
        %v434 = vrot.slane %v411, %v433
        %v436 = vmul.f32 %v429, %v434
        %v438 = vlaneseq
        %v439 = vshrl.u32 %v438, 7
        %v440 = vsub.s32 0, %v439
        %v441 = vrot.slane %v412, %v440
        %v443 = vadd.f32 %v436, %v441
        %v444 = vld [vmem:[#allocation5] sm:$0xff]
        %v445 = vld [vmem:[#allocation5 + $0x8] sm:$0xff]
        %v446 = vld [vmem:[#allocation5 + $0x10] sm:$0xff]
        %v447 = vld [vmem:[#allocation5 + $0x18] sm:$0xff]
        %v448 = vld [vmem:[%s4] sm:$0x1]
        %v450 = vlaneseq
        %v451 = vshrl.u32 %v450, 7
        %v452 = vsub.s32 0, %v451
        %v453 = vrot.slane %v448, %v452
        %v456 = vsel %vm413, %v443, 0
        %458 = vmatprep.subr.mxu0 0.0
        %459 = vmatpush1.msra.mxu0 %v444
        %460 = vmatprep.subr.mxu0 0.0
        %461 = vmatpush1.msra.mxu0 %v445
        %462 = vmatprep.subr.mxu0 0.0
        %463 = vmatpush1.msra.mxu0 %v446
        %464 = vmatprep.subr.mxu0 0.0
        %465 = vmatpush1.msra.mxu0 %v447
        %466 = vmatprep.subr.mxu0 0.0
        %467 = vmatpush1.msra.mxu0 0.0
        %468 = vmatprep.subr.mxu0 0.0
        %469 = vmatpush1.msra.mxu0 0.0
        %470 = vmatprep.subr.mxu0 0.0
        %471 = vmatpush1.msra.mxu0 0.0
        %472 = vmatprep.subr.mxu0 0.0
        %473 = vmatpush1.msra.mxu0 0.0
        %474 = vmatprep.subr.mxu0 0.0
        %475 = vmatpush1.msra.mxu0 0.0
        %476 = vmatprep.subr.mxu0 0.0
        %477 = vmatpush1.msra.mxu0 0.0
        %478 = vmatprep.subr.mxu0 0.0
        %479 = vmatpush1.msra.mxu0 0.0
        %480 = vmatprep.subr.mxu0 0.0
        %481 = vmatpush1.msra.mxu0 0.0
        %482 = vmatprep.subr.mxu0 0.0
        %483 = vmatpush1.msra.mxu0 0.0
        %484 = vmatprep.subr.mxu0 0.0
        %485 = vmatpush1.msra.mxu0 0.0
        %486 = vmatprep.subr.mxu0 0.0
        %487 = vmatpush1.msra.mxu0 0.0
        %488 = vmatprep.subr.mxu0 0.0
        %489 = vmatpush1.msra.mxu0 0.0
        %490 = vmatprep.subr.mxu0 0.0
        %491 = vmatpush1.msra.mxu0 0.0
        %492 = vmatprep.subr.mxu0 0.0
        %493 = vmatpush1.msra.mxu0 0.0
        %494 = vmatprep.subr.mxu0 0.0
        %495 = vmatpush1.msra.mxu0 0.0
        %496 = vmatprep.subr.mxu0 0.0
        %497 = vmatpush1.msra.mxu0 0.0
        %498 = vmatprep.subr.mxu0 0.0
        %499 = vmatpush1.msra.mxu0 0.0
        %500 = vmatprep.subr.mxu0 0.0
        %501 = vmatpush1.msra.mxu0 0.0
        %502 = vmatprep.subr.mxu0 0.0
        %503 = vmatpush1.msra.mxu0 0.0
        %504 = vmatprep.subr.mxu0 0.0
        %505 = vmatpush1.msra.mxu0 0.0
        %506 = vmatprep.subr.mxu0 0.0
        %507 = vmatpush1.msra.mxu0 0.0
        %508 = vmatprep.subr.mxu0 0.0
        %509 = vmatpush1.msra.mxu0 0.0
        %510 = vmatprep.subr.mxu0 0.0
        %511 = vmatpush1.msra.mxu0 0.0
        %512 = vmatprep.subr.mxu0 0.0
        %513 = vmatpush1.msra.mxu0 0.0
        %514 = vmatprep.subr.mxu0 0.0
        %515 = vmatpush1.msra.mxu0 0.0
        %516 = vmatprep.subr.mxu0 0.0
        %517 = vmatpush1.msra.mxu0 0.0
        %518 = vmatprep.subr.mxu0 0.0
        %519 = vmatpush1.msra.mxu0 0.0
        %520 = vmatprep.subr.mxu0 0.0
        %521 = vmatpush1.msra.mxu0 0.0
        %522 = vmatprep.mubr.f32.mxu0 0.0
        %523 = vmatmul.mubr.f32.gmra.mrb[0].mxu0 %v456
        %v524 = vpop.f32.mrb[0].mxu0
        %v525 = vadd.f32 %v453, %v524
        %v526 = vpop.f32.mrb[0].mxu0
        %527 = vdwg.mxu0
        %v528 = vmul.f32 %v525, 0.5
        %v529 = vmul.f32 %v525, 0.70710677
        %v530 = verf.f32.pop %v529
        %v531 = vadd.f32 %v530, 1.0
        %v532 = vmul.f32 %v528, %v531
        %v533 = vld [vmem:[#allocation7] sm:$0xff]
        %v534 = vld [vmem:[#allocation7 + $0x8] sm:$0xff]
        %v535 = vld [vmem:[#allocation7 + $0x10] sm:$0xff]
        %v536 = vld [vmem:[#allocation7 + $0x18] sm:$0xff]
        %v537 = vld [vmem:[%s409] sm:$0x1]
        %v539 = vlaneseq
        %v540 = vshrl.u32 %v539, 7
        %v541 = vsub.s32 0, %v540
        %v542 = vrot.slane %v537, %v541
        %v545 = vsel %vm413, %v532, 0
        %547 = vmatprep.subr.mxu0 0.0
        %548 = vmatpush1.msra.mxu0 %v533
        %549 = vmatprep.subr.mxu0 0.0
        %550 = vmatpush1.msra.mxu0 %v534
        %551 = vmatprep.subr.mxu0 0.0
        %552 = vmatpush1.msra.mxu0 %v535
        %553 = vmatprep.subr.mxu0 0.0
        %554 = vmatpush1.msra.mxu0 %v536
        %555 = vmatprep.subr.mxu0 0.0
        %556 = vmatpush1.msra.mxu0 0.0
        %557 = vmatprep.subr.mxu0 0.0
        %558 = vmatpush1.msra.mxu0 0.0
        %559 = vmatprep.subr.mxu0 0.0
        %560 = vmatpush1.msra.mxu0 0.0
        %561 = vmatprep.subr.mxu0 0.0
        %562 = vmatpush1.msra.mxu0 0.0
        %563 = vmatprep.subr.mxu0 0.0
        %564 = vmatpush1.msra.mxu0 0.0
        %565 = vmatprep.subr.mxu0 0.0
        %566 = vmatpush1.msra.mxu0 0.0
        %567 = vmatprep.subr.mxu0 0.0
        %568 = vmatpush1.msra.mxu0 0.0
        %569 = vmatprep.subr.mxu0 0.0
        %570 = vmatpush1.msra.mxu0 0.0
        %571 = vmatprep.subr.mxu0 0.0
        %572 = vmatpush1.msra.mxu0 0.0
        %573 = vmatprep.subr.mxu0 0.0
        %574 = vmatpush1.msra.mxu0 0.0
        %575 = vmatprep.subr.mxu0 0.0
        %576 = vmatpush1.msra.mxu0 0.0
        %577 = vmatprep.subr.mxu0 0.0
        %578 = vmatpush1.msra.mxu0 0.0
        %579 = vmatprep.subr.mxu0 0.0
        %580 = vmatpush1.msra.mxu0 0.0
        %581 = vmatprep.subr.mxu0 0.0
        %582 = vmatpush1.msra.mxu0 0.0
        %583 = vmatprep.subr.mxu0 0.0
        %584 = vmatpush1.msra.mxu0 0.0
        %585 = vmatprep.subr.mxu0 0.0
        %586 = vmatpush1.msra.mxu0 0.0
        %587 = vmatprep.subr.mxu0 0.0
        %588 = vmatpush1.msra.mxu0 0.0
        %589 = vmatprep.subr.mxu0 0.0
        %590 = vmatpush1.msra.mxu0 0.0
        %591 = vmatprep.subr.mxu0 0.0
        %592 = vmatpush1.msra.mxu0 0.0
        %593 = vmatprep.subr.mxu0 0.0
        %594 = vmatpush1.msra.mxu0 0.0
        %595 = vmatprep.subr.mxu0 0.0
        %596 = vmatpush1.msra.mxu0 0.0
        %597 = vmatprep.subr.mxu0 0.0
        %598 = vmatpush1.msra.mxu0 0.0
        %599 = vmatprep.subr.mxu0 0.0
        %600 = vmatpush1.msra.mxu0 0.0
        %601 = vmatprep.subr.mxu0 0.0
        %602 = vmatpush1.msra.mxu0 0.0
        %603 = vmatprep.subr.mxu0 0.0
        %604 = vmatpush1.msra.mxu0 0.0
        %605 = vmatprep.subr.mxu0 0.0
        %606 = vmatpush1.msra.mxu0 0.0
        %607 = vmatprep.subr.mxu0 0.0
        %608 = vmatpush1.msra.mxu0 0.0
        %609 = vmatprep.subr.mxu0 0.0
        %610 = vmatpush1.msra.mxu0 0.0
        %611 = vmatprep.mubr.f32.mxu0 0.0
        %612 = vmatmul.mubr.f32.gmra.mrb[0].mxu0 %v545
        %v613 = vpop.f32.mrb[0].mxu0
        %v614 = vadd.f32 %v542, %v613
        %v615 = vpop.f32.mrb[0].mxu0
        %616 = vdwg.mxu0
        %v617 = vld [vmem:[%s7] sm:$0x1]
        %v618 = vld [vmem:[%s8] sm:$0x1]
        %vm619 = vcmask 523264
        %v620 = vsel %vm619, %v614, 0.0
        %621 = vadd.xlane.f32.xlu0 %v620
        %v622 = vpop.xlane.xlu0 %621
        %v623 = vmul.f32 %v614, %v614
        %v624 = vsel %vm619, %v623, 0.0
        %625 = vadd.xlane.f32.xlu0 %v624
        %v626 = vpop.xlane.xlu0 %625
        %v627 = vmul.f32 %v622, 0.015625
        %v628 = vmul.f32 %v626, 0.015625
        %v629 = vmul.f32 %v627, %v627
        %v630 = vsub.f32 %v628, %v629
        %v631 = vmax.f32 %v630, 0.0
        %v632 = vsub.f32 %v614, %v627
        %v633 = vadd.f32 %v631, 1e-05
        %v634 = vrsqrt.pop %v633
        %v635 = vmul.f32 %v632, %v634
        %v637 = vlaneseq
        %v638 = vshrl.u32 %v637, 7
        %v639 = vsub.s32 0, %v638
        %v640 = vrot.slane %v617, %v639
        %v642 = vmul.f32 %v635, %v640
        %v644 = vlaneseq
        %v645 = vshrl.u32 %v644, 7
        %v646 = vsub.s32 0, %v645
        %v647 = vrot.slane %v618, %v646
        %v649 = vadd.f32 %v642, %v647
        %650 = vst.msk [vmem:[%s406] sm:$0xff] %vm619, %v649
        %s651 = sand.u32 %s251, 1
        %s652 = scalar_lea.sflag [#allocation4], %s651
        %s653 = sand.u32 %s251, 1
        %s654 = smul.addr %s653, 8
        %s655 = scalar_lea.vmem [#allocation8], %s654
        // Predicated region
        $region69: #{tpu_custom_call.1} parent=55 // pred_check
          %p656 = pneg %p261
        $region70: #{tpu_custom_call.1} parent=55 // pred_check_branch
          %658 = sbr.rel (%p656) target = $region72
        $region71: #{tpu_custom_call.1} parent=55 // pred_region
          %s660 = ssub.s32 128, 128
          %661 = vsyncadd %s652, %s660
          %s662 = smul.addr %s31, 128
          %s663 = scalar_lea.hbm %s9, %s662
          %s665 = sshll.u32 %s655, 4
          %s666 = int_to_ptr.vmem [resolvable:$true] %s665
          %668 = dma.vmem_to_hbm [thread:$0]  %s666, 128, %s663, %s652
        $region72: #{tpu_custom_call.1} parent=55 // pred_fallthru
          _
      $region56: #{tpu_custom_call.1} parent=5 // pred_fallthru
        _
      %p669 = scmp.le.s32.totalorder 2, %s22
      // Predicated region
      $region73: #{tpu_custom_call.1} parent=5 // pred_check
        %p670 = pneg %p669
      $region74: #{tpu_custom_call.1} parent=5 // pred_check_branch
        %672 = sbr.rel (%p670) target = $region76
      $region75: #{tpu_custom_call.1} parent=5 // pred_region
        %s673 = ssub.s32 %s22, 2
        // Predicated region
        $region77: #{tpu_custom_call.1} parent=75 // pred_check
          %p674 = pneg %p267
        $region78: #{tpu_custom_call.1} parent=75 // pred_check_branch
          %676 = sbr.rel (%p674) target = $region80
        $region79: #{tpu_custom_call.1} parent=75 // pred_region
          %s677 = sand.u32 %s252, 1
          %s678 = scalar_lea.sflag [#allocation4], %s677
          %s679 = sand.u32 %s252, 1
          %s680 = smul.addr %s679, 8
          %s681 = scalar_lea.vmem [#allocation8], %s680
          %682 = dma.done %s678, 128
        $region80: #{tpu_custom_call.1} parent=75 // pred_fallthru
          _
      $region76: #{tpu_custom_call.1} parent=5 // pred_fallthru
        _
    $region6: #{tpu_custom_call.1} parent=1 // loop_footer
      %s26 = sadd.s32 1, %s22
    $region7: #{tpu_custom_call.1} parent=1 // loop_footer_branch
      %21 = sbr.rel target = $region3
    $region8: #{tpu_custom_call.1} parent=1 // loop_exit
      _
    %683 = vsyncpa [#allocation3], 1
    %s684 = scalar_lea.sflag [#allocation3], 1
    %685 = vsyncpa %s684, 1
    %686 = vsyncpa [#allocation6], 1
    %687 = vsyncpa [#allocation4], 1
    %s688 = scalar_lea.sflag [#allocation4], 1
    %689 = vsyncpa %s688, 1

</llo_original>
